<compile_context>
chip_gen: v5e
topology: v5e:2x2
jax: 0.10.0
libtpu: 0.0.40
codegen_flags: <defaults>
</compile_context>

<pallas_src>
import jax
import jax.numpy as jnp
from jax import lax
from jax.experimental import pallas as pl
from jax.experimental.pallas import tpu as pltpu


def _jaccard_partial_kernel(logits_ref, targets_ref, inter_ref, card_ref):
    # logits_ref: (1, C, TILE_H, W), targets_ref: (1, TILE_H, W)
    x = logits_ref[0].astype(jnp.float32)           # (C, TH, W)
    t = targets_ref[0]                              # (TH, W) int32

    # Numerically-stable softmax over the class axis (leading axis ->
    # elementwise max/exp over (TH, W) vregs, no cross-lane work).
    m = jnp.max(x, axis=0, keepdims=True)           # (1, TH, W)
    e = jnp.exp(x - m)                              # (C, TH, W)
    inv = 1.0 / jnp.sum(e, axis=0, keepdims=True)   # (1, TH, W)
    p = e * inv                                     # probas (C, TH, W)

    # One-hot via class-index iota vs. targets (no dynamic gather).
    cls = lax.broadcasted_iota(jnp.int32, x.shape, 0)       # (C, TH, W)
    is_tgt = cls == t[None]                                 # (C, TH, W) bool
    onehot = is_tgt.astype(jnp.float32)

    # Partial sums over this H tile (reduce sublane axis), keep (C, W).
    inter_ref[0, 0] = jnp.sum(jnp.where(is_tgt, p, 0.0), axis=1)    # (C, W)
    card_ref[0, 0] = jnp.sum(p + onehot, axis=1)                    # (C, W)


def _choose_tile_h(h, c, w, itemsize=4, target_bytes=4 << 20):
    """Largest H tile (divisor of H, multiple of 8 or == H) within the budget."""
    if c * h * w * itemsize <= target_bytes:
        return h
    best = None
    for tile in range(8, h, 8):
        if h % tile:
            continue
        if c * tile * w * itemsize <= target_bytes:
            best = tile                      # keep the largest fitting divisor
        else:
            break                            # block bytes grow with tile
    if best is not None:
        return best
    for tile in range(8, h, 8):             # nothing fits: smallest valid tile
        if h % tile == 0:
            return tile
    return h


def jaccard_loss(logits, targets, weights, *, eps=1e-7, tile_h=None,
                 vmem_limit_bytes=32 * 1024 * 1024):
    """JaccardLoss.forward for num_classes > 1.

    logits: (N, C, H, W) float; targets: (N, H, W) int; weights: (C,) float.
    """
    # TODO(synk): num_classes == 1 sigmoid branch of the module not implemented.
    # TODO(synk): 4-D (B, 1, H, W) targets not supported (the reference module
    # itself fails at jacc_loss.mean(1) for that shape), so we require (N,H,W).
    n, c, h, w = logits.shape
    assert targets.shape == (n, h, w), (targets.shape, (n, h, w))
    t = targets.astype(jnp.int32)

    if tile_h is None:
        tile_h = _choose_tile_h(h, c, w, itemsize=logits.dtype.itemsize)
    assert h % tile_h == 0 and (tile_h % 8 == 0 or tile_h == h), tile_h
    gh = h // tile_h

    inter_p, card_p = pl.pallas_call(
        _jaccard_partial_kernel,
        out_shape=(
            jax.ShapeDtypeStruct((n, gh, c, w), jnp.float32),
            jax.ShapeDtypeStruct((n, gh, c, w), jnp.float32),
        ),
        grid=(n, gh),
        in_specs=[
            pl.BlockSpec((1, c, tile_h, w), lambda ni, hi: (ni, 0, hi, 0)),
            pl.BlockSpec((1, tile_h, w), lambda ni, hi: (ni, hi, 0)),
        ],
        out_specs=(
            pl.BlockSpec((1, 1, c, w), lambda ni, hi: (ni, hi, 0, 0)),
            pl.BlockSpec((1, 1, c, w), lambda ni, hi: (ni, hi, 0, 0)),
        ),
        compiler_params=pltpu.CompilerParams(
            dimension_semantics=("parallel", "parallel"),
            vmem_limit_bytes=vmem_limit_bytes),
    )(logits, t)

    # Tiny final combine (C*W values) in plain JAX.
    inter = jnp.sum(inter_p, axis=(0, 1))            # (C, W)
    card = jnp.sum(card_p, axis=(0, 1))              # (C, W)
    union = card - inter
    jacc = inter / (union + jnp.float32(eps))        # (C, W)
    jacc_mean = jnp.mean(jacc, axis=1)               # (C,)
    w_vec = weights.astype(jnp.float32)
    return 1.0 - jnp.dot(jacc_mean, w_vec) / jnp.sum(w_vec)


def jaccard_loss_ref(logits, targets, weights, *, eps=1e-7):
    """Plain-JAX reference mirroring the PyTorch semantics (3-D targets)."""
    n, c, h, w = logits.shape
    probas = jax.nn.softmax(logits.astype(jnp.float32), axis=1)       # (N,C,H,W)
    one_hot = jax.nn.one_hot(targets, c, dtype=jnp.float32)           # (N,H,W,C)
    one_hot = jnp.transpose(one_hot, (0, 3, 1, 2))                    # (N,C,H,W)
    dims = (0, 2)                       # torch: (0,) + range(2, targets.ndim)
    inter = jnp.sum(probas * one_hot, axis=dims)                      # (C, W)
    card = jnp.sum(probas + one_hot, axis=dims)                       # (C, W)
    union = card - inter
    jacc = inter / (union + jnp.float32(eps))
    jacc_mean = jnp.mean(jacc, axis=1)                                # (C,)
    w_vec = weights.astype(jnp.float32)
    return 1.0 - jnp.dot(jacc_mean, w_vec) / jnp.sum(w_vec)


if __name__ == "__main__":
    key = jax.random.PRNGKey(0)
    k_logits, k_targets, k_weights = jax.random.split(key, 3)

    N, C, H, W = 2, 4, 16, 16
    logits = jax.random.normal(k_logits, (N, C, H, W), dtype=jnp.float32)
    targets = jax.random.randint(k_targets, (N, H, W), 0, C, dtype=jnp.int32)
    weights = jax.random.uniform(k_weights, (C,), dtype=jnp.float32) + 0.5

    ref = jaccard_loss_ref(logits, targets, weights)

    # Single-tile path (TILE_H == H).
    out = jaccard_loss(logits, targets, weights)
    out = jax.block_until_ready(out)
    assert jnp.allclose(out, ref, rtol=1e-5, atol=1e-5), (out, ref)

    # Multi-tile grid path (forces H tiling and the parallel partial-sum path).
    out2 = jaccard_loss(logits, targets, weights, tile_h=8)
    out2 = jax.block_until_ready(out2)
    assert jnp.allclose(out2, ref, rtol=1e-5, atol=1e-5), (out2, ref)

    print("KERNEL_OK")
</pallas_src>

<mosaic_0001>
module attributes {stable_mosaic.version = 11 : i64} {
  func.func @_jaccard_partial_kernel(%arg0: i32, %arg1: i32, %arg2: memref<1x4x16x16xf32, #tpu.memory_space<vmem>>, %arg3: memref<1x16x16xi32, #tpu.memory_space<vmem>>, %arg4: memref<1x1x4x16xf32, #tpu.memory_space<vmem>>, %arg5: memref<1x1x4x16xf32, #tpu.memory_space<vmem>>) attributes {dimension_semantics = [#tpu.dimension_semantics<parallel>, #tpu.dimension_semantics<parallel>], iteration_bounds = array<i64: 2, 1>, scalar_prefetch = 0 : i64, scratch_operands = 0 : i64, tpu.core_type = #tpu.core_type<tc>, window_params = [{transform_indices = @transform_0, window_bounds = array<i64: 1, 4, 16, 16>}, {transform_indices = @transform_1, window_bounds = array<i64: 1, 16, 16>}, {transform_indices = @transform_2, window_bounds = array<i64: 1, 1, 4, 16>}, {transform_indices = @transform_3, window_bounds = array<i64: 1, 1, 4, 16>}]} {
    %c0 = arith.constant 0 : index
    %c0_0 = arith.constant 0 : index
    %c0_1 = arith.constant 0 : index
    %c0_2 = arith.constant 0 : index
    %0 = vector.load %arg2[%c0, %c0_0, %c0_1, %c0_2] : memref<1x4x16x16xf32, #tpu.memory_space<vmem>>, vector<1x4x16x16xf32>
    %1 = vector.shape_cast %0 : vector<1x4x16x16xf32> to vector<4x16x16xf32>
    %c0_3 = arith.constant 0 : index
    %c0_4 = arith.constant 0 : index
    %c0_5 = arith.constant 0 : index
    %2 = vector.load %arg3[%c0_3, %c0_4, %c0_5] : memref<1x16x16xi32, #tpu.memory_space<vmem>>, vector<1x16x16xi32>
    %3 = vector.shape_cast %2 : vector<1x16x16xi32> to vector<16x16xi32>
    %cst = arith.constant dense<0xFF800000> : vector<16x16xf32>
    %4 = vector.multi_reduction <maximumf>, %1, %cst [0] : vector<4x16x16xf32> to vector<16x16xf32>
    %5 = vector.shape_cast %4 : vector<16x16xf32> to vector<1x16x16xf32>
    %6 = vector.broadcast %5 : vector<1x16x16xf32> to vector<4x16x16xf32>
    %7 = arith.subf %1, %6 : vector<4x16x16xf32>
    %8 = math.exp %7 : vector<4x16x16xf32>
    %cst_6 = arith.constant dense<0.000000e+00> : vector<16x16xf32>
    %9 = vector.multi_reduction <add>, %8, %cst_6 [0] : vector<4x16x16xf32> to vector<16x16xf32>
    %10 = vector.shape_cast %9 : vector<16x16xf32> to vector<1x16x16xf32>
    %cst_7 = arith.constant 1.000000e+00 : f32
    %11 = vector.broadcast %cst_7 : f32 to vector<1x16x16xf32>
    %12 = arith.divf %11, %10 : vector<1x16x16xf32>
    %13 = vector.broadcast %12 : vector<1x16x16xf32> to vector<4x16x16xf32>
    %14 = arith.mulf %8, %13 : vector<4x16x16xf32>
    %15 = tpu.iota {dimensions = array<i32: 0>} : vector<4x16x16xi32>
    %16 = vector.shape_cast %3 : vector<16x16xi32> to vector<1x16x16xi32>
    %17 = vector.broadcast %16 : vector<1x16x16xi32> to vector<4x16x16xi32>
    %18 = arith.cmpi eq, %15, %17 : vector<4x16x16xi32>
    %19 = arith.extui %18 : vector<4x16x16xi1> to vector<4x16x16xi32>
    %20 = arith.sitofp %19 : vector<4x16x16xi32> to vector<4x16x16xf32>
    %cst_8 = arith.constant 0.000000e+00 : f32
    %21 = vector.broadcast %cst_8 : f32 to vector<4x16x16xf32>
    %22 = arith.select %18, %14, %21 : vector<4x16x16xi1>, vector<4x16x16xf32>
    %cst_9 = arith.constant dense<0.000000e+00> : vector<4x16xf32>
    %23 = vector.multi_reduction <add>, %22, %cst_9 [1] : vector<4x16x16xf32> to vector<4x16xf32>
    %c0_10 = arith.constant 0 : index
    %c0_11 = arith.constant 0 : index
    %c0_12 = arith.constant 0 : index
    %c0_13 = arith.constant 0 : index
    %24 = vector.load %arg4[%c0_10, %c0_11, %c0_12, %c0_13] : memref<1x1x4x16xf32, #tpu.memory_space<vmem>>, vector<1x1x4x16xf32>
    %25 = vector.shape_cast %24 : vector<1x1x4x16xf32> to vector<4x16xf32>
    %26 = vector.shape_cast %23 : vector<4x16xf32> to vector<1x1x4x16xf32>
    tpu.vector_store %arg4[%c0_10, %c0_11, %c0_12, %c0_13], %26 {strides = array<i32>} : memref<1x1x4x16xf32, #tpu.memory_space<vmem>>, vector<1x1x4x16xf32>,
    %27 = arith.addf %14, %20 : vector<4x16x16xf32>
    %cst_14 = arith.constant dense<0.000000e+00> : vector<4x16xf32>
    %28 = vector.multi_reduction <add>, %27, %cst_14 [1] : vector<4x16x16xf32> to vector<4x16xf32>
    %c0_15 = arith.constant 0 : index
    %c0_16 = arith.constant 0 : index
    %c0_17 = arith.constant 0 : index
    %c0_18 = arith.constant 0 : index
    %29 = vector.load %arg5[%c0_15, %c0_16, %c0_17, %c0_18] : memref<1x1x4x16xf32, #tpu.memory_space<vmem>>, vector<1x1x4x16xf32>
    %30 = vector.shape_cast %29 : vector<1x1x4x16xf32> to vector<4x16xf32>
    %31 = vector.shape_cast %28 : vector<4x16xf32> to vector<1x1x4x16xf32>
    tpu.vector_store %arg5[%c0_15, %c0_16, %c0_17, %c0_18], %31 {strides = array<i32>} : memref<1x1x4x16xf32, #tpu.memory_space<vmem>>, vector<1x1x4x16xf32>,
    return
  }
  func.func @transform_0(%arg0: i32, %arg1: i32) -> (i32, i32, i32, i32) {
    %c0_i32 = arith.constant 0 : i32
    %c0_i32_0 = arith.constant 0 : i32
    %c0_i32_1 = arith.constant 0 : i32
    return %arg0, %c0_i32, %arg1, %c0_i32_0 : i32, i32, i32, i32
  }
  func.func @transform_1(%arg0: i32, %arg1: i32) -> (i32, i32, i32) {
    %c0_i32 = arith.constant 0 : i32
    %c0_i32_0 = arith.constant 0 : i32
    return %arg0, %arg1, %c0_i32 : i32, i32, i32
  }
  func.func @transform_2(%arg0: i32, %arg1: i32) -> (i32, i32, i32, i32) {
    %c0_i32 = arith.constant 0 : i32
    %c0_i32_0 = arith.constant 0 : i32
    %c0_i32_1 = arith.constant 0 : i32
    return %arg0, %arg1, %c0_i32, %c0_i32_0 : i32, i32, i32, i32
  }
  func.func @transform_3(%arg0: i32, %arg1: i32) -> (i32, i32, i32, i32) {
    %c0_i32 = arith.constant 0 : i32
    %c0_i32_0 = arith.constant 0 : i32
    %c0_i32_1 = arith.constant 0 : i32
    return %arg0, %arg1, %c0_i32, %c0_i32_0 : i32, i32, i32, i32
  }
}

</mosaic_0001>

<llo_original>
// kernel: tpu_custom_call.1
$region0: #{tpu_custom_call.1}
  #allocation0 [shape = 'u32[]', space=smem, size = 0x4, offset = 0x4, fixed_abs, tag = 'smem constant byte address 0x4 - core index']
  #allocation1 [shape = 'u32[72,128]{1,0:T(1,128)}', space=vmem, size = 0x9000, scoped, tag = 'internal scratch']
  %s0 = inlined_call_operand.hbm [shape: f32[2,4,16,16], index: 0, kind: input, shape index: {}]
  %s1 = inlined_call_operand.hbm [shape: s32[2,16,16], index: 1, kind: input, shape index: {}]
  %s2 = inlined_call_operand.hbm [shape: f32[2,1,4,16], index: 2, kind: output, shape index: {0}]
  %s3 = inlined_call_operand.hbm [shape: f32[2,1,4,16], index: 3, kind: output, shape index: {1}]
  %4 = xla_tuple %s2, %s3
  %s5 = sld [smem:[#allocation0]]
  $region57: #{tpu_custom_call.1} parent=0
    _
  %s7 = ssub.s32 1, %s5
  %s8 = scalar_select 0, %s7, %s5
  $region1: #{tpu_custom_call.1} parent=0
    #allocation2 [shape = 'u8[65536]{0}', space=vmem, size = 0x10000, scoped, tag = 'input window, operand 0']
    #allocation3 [shape = 's32[2]{0}', space=sflag, size = 0x8, scoped, tag = 'scoped memory for tpu_custom_call.1']
    #allocation4 [shape = 's32[2]{0}', space=sflag, size = 0x8, scoped, tag = 'scoped memory for tpu_custom_call.1']
    #allocation5 [shape = 'u8[16384]{0}', space=vmem, size = 0x4000, scoped, tag = 'input window, operand 1']
    #allocation6 [shape = 's32[2]{0}', space=sflag, size = 0x8, scoped, tag = 'scoped memory for tpu_custom_call.1']
    #allocation7 [shape = 'u8[4096]{0}', space=vmem, size = 0x1000, scoped, tag = 'output window, operand 0']
    #allocation8 [shape = 'u8[4096]{0}', space=vmem, size = 0x1000, scoped, tag = 'output window, operand 1']
    #allocation9 [shape = 's32[2]{0}', space=sflag, size = 0x8, scoped, tag = 'scoped memory for tpu_custom_call.1']
    %9 = vsyncpa [#allocation3], 0
    %s10 = scalar_lea.sflag [#allocation3], 1
    %11 = vsyncpa %s10, 0
    %12 = vsyncpa [#allocation6], 0
    %s13 = scalar_lea.sflag [#allocation6], 1
    %14 = vsyncpa %s13, 0
    %15 = vsyncpa [#allocation4], 0
    %s16 = scalar_lea.sflag [#allocation4], 1
    %17 = vsyncpa %s16, 0
    %18 = vsyncpa [#allocation9], 0
    %s19 = scalar_lea.sflag [#allocation9], 1
    %20 = vsyncpa %s19, 0
    loop: start=0, step=1, limit=4
    $region2: #{tpu_custom_call.1} parent=1 // loop_pre_header
      _
    $region3: #{tpu_custom_call.1} parent=1 // loop_header
      %s22 = sphi 0, %s26
      %p23 = scmp.ge.s32.totalorder %s22, 4
      %s29 = sphi 0, %s41
      %s30 = sphi 0, %s37
      %s31 = sphi 0, %s29
      %s32 = sphi 0, %s30
      %s33 = sphi 0, %s31
      %s34 = sphi 0, %s32
      %s46 = sphi 0, %s48
      %s49 = sphi 0, %s46
      %s50 = sphi 0, %s49
      %s66 = sphi 0, %s50
      %s74 = sphi 0, %s76
      %s77 = sphi 0, %s74
      %s78 = sphi 0, %s77
      %s94 = sphi 0, %s78
      %s102 = sphi 0, %s104
      %s105 = sphi 0, %s102
      %s106 = sphi 0, %s105
      %s122 = sphi 0, %s106
      %s130 = sphi 0, %s132
      %s133 = sphi 0, %s130
      %s134 = sphi 0, %s133
      %s150 = sphi 0, %s134
    $region4: #{tpu_custom_call.1} parent=1 // loop_header_branch
      %25 = sbr.rel (%p23) target = $region8
    $region5: #{tpu_custom_call.1} parent=1 // loop_body
      %s27 = ssub.s32 %s22, 1
      %s28 = ssub.s32 %s22, 2
      %s35 = sadd.s32 1, %s30
      %p36 = scmp.ge.s32.totalorder %s35, 1
      %s37 = scalar_select %p36, 0, %s35
      %s38 = sadd.s32 1, %s29
      %s39 = scalar_select %p36, %s38, %s29
      %p40 = scmp.ge.s32.totalorder %s39, 2
      %s41 = scalar_select %p40, 0, %s39
      %s42 = ssub.s32 %s29, %s41
      %s43 = ssub.s32 %s30, %s37
      %s44 = sor.u32 %s42, %s43
      %p45 = scmp.eq.s32.totalorder %s44, 0
      %s47 = sadd.s32 %s46, 1
      %s48 = scalar_select %p45, %s46, %s47
      %p51 = pneg %p45
      %p52 = scmp.eq.s32.totalorder %s22, 1
      %p53 = por %p51, %p52
      %p54 = scmp.ne.s32.totalorder %s46, %s49
      %p55 = scmp.eq.s32.totalorder %s22, 0
      %p56 = por %p54, %p55
      %p57 = scmp.ne.s32.totalorder %s46, %s49
      %p58 = scmp.eq.s32.totalorder %s27, 1
      %p59 = por %p57, %p58
      %p60 = scmp.ne.s32.totalorder %s49, %s50
      %p61 = scmp.eq.s32.totalorder %s27, 0
      %p62 = por %p60, %p61
      %p63 = scmp.ne.s32.totalorder %s49, %s50
      %p64 = scmp.eq.s32.totalorder %s28, 1
      %p65 = por %p63, %p64
      %p67 = scmp.ne.s32.totalorder %s50, %s66
      %p68 = scmp.eq.s32.totalorder %s28, 0
      %p69 = por %p67, %p68
      %s70 = ssub.s32 %s29, %s41
      %s71 = ssub.s32 %s30, %s37
      %s72 = sor.u32 %s70, %s71
      %p73 = scmp.eq.s32.totalorder %s72, 0
      %s75 = sadd.s32 %s74, 1
      %s76 = scalar_select %p73, %s74, %s75
      %p79 = pneg %p73
      %p80 = scmp.eq.s32.totalorder %s22, 1
      %p81 = por %p79, %p80
      %p82 = scmp.ne.s32.totalorder %s74, %s77
      %p83 = scmp.eq.s32.totalorder %s22, 0
      %p84 = por %p82, %p83
      %p85 = scmp.ne.s32.totalorder %s74, %s77
      %p86 = scmp.eq.s32.totalorder %s27, 1
      %p87 = por %p85, %p86
      %p88 = scmp.ne.s32.totalorder %s77, %s78
      %p89 = scmp.eq.s32.totalorder %s27, 0
      %p90 = por %p88, %p89
      %p91 = scmp.ne.s32.totalorder %s77, %s78
      %p92 = scmp.eq.s32.totalorder %s28, 1
      %p93 = por %p91, %p92
      %p95 = scmp.ne.s32.totalorder %s78, %s94
      %p96 = scmp.eq.s32.totalorder %s28, 0
      %p97 = por %p95, %p96
      %s98 = ssub.s32 %s29, %s41
      %s99 = ssub.s32 %s30, %s37
      %s100 = sor.u32 %s98, %s99
      %p101 = scmp.eq.s32.totalorder %s100, 0
      %s103 = sadd.s32 %s102, 1
      %s104 = scalar_select %p101, %s102, %s103
      %p107 = pneg %p101
      %p108 = scmp.eq.s32.totalorder %s22, 1
      %p109 = por %p107, %p108
      %p110 = scmp.ne.s32.totalorder %s102, %s105
      %p111 = scmp.eq.s32.totalorder %s22, 0
      %p112 = por %p110, %p111
      %p113 = scmp.ne.s32.totalorder %s102, %s105
      %p114 = scmp.eq.s32.totalorder %s27, 1
      %p115 = por %p113, %p114
      %p116 = scmp.ne.s32.totalorder %s105, %s106
      %p117 = scmp.eq.s32.totalorder %s27, 0
      %p118 = por %p116, %p117
      %p119 = scmp.ne.s32.totalorder %s105, %s106
      %p120 = scmp.eq.s32.totalorder %s28, 1
      %p121 = por %p119, %p120
      %p123 = scmp.ne.s32.totalorder %s106, %s122
      %p124 = scmp.eq.s32.totalorder %s28, 0
      %p125 = por %p123, %p124
      %s126 = ssub.s32 %s29, %s41
      %s127 = ssub.s32 %s30, %s37
      %s128 = sor.u32 %s126, %s127
      %p129 = scmp.eq.s32.totalorder %s128, 0
      %s131 = sadd.s32 %s130, 1
      %s132 = scalar_select %p129, %s130, %s131
      %p135 = pneg %p129
      %p136 = scmp.eq.s32.totalorder %s22, 1
      %p137 = por %p135, %p136
      %p138 = scmp.ne.s32.totalorder %s130, %s133
      %p139 = scmp.eq.s32.totalorder %s22, 0
      %p140 = por %p138, %p139
      %p141 = scmp.ne.s32.totalorder %s130, %s133
      %p142 = scmp.eq.s32.totalorder %s27, 1
      %p143 = por %p141, %p142
      %p144 = scmp.ne.s32.totalorder %s133, %s134
      %p145 = scmp.eq.s32.totalorder %s27, 0
      %p146 = por %p144, %p145
      %p147 = scmp.ne.s32.totalorder %s133, %s134
      %p148 = scmp.eq.s32.totalorder %s28, 1
      %p149 = por %p147, %p148
      %p151 = scmp.ne.s32.totalorder %s134, %s150
      %p152 = scmp.eq.s32.totalorder %s28, 0
      %p153 = por %p151, %p152
      %p154 = scmp.le.s32.totalorder 1, %s22
      %p155 = scmp.lt.s32.totalorder %s22, 3
      %p156 = pnand %p154, %p155
      %p157 = pneg %p156
      // Predicated region
      $region9: #{tpu_custom_call.1} parent=5 // pred_check
        _
      $region10: #{tpu_custom_call.1} parent=5 // pred_check_branch
        %159 = sbr.rel (%p156) target = $region12
      $region11: #{tpu_custom_call.1} parent=5 // pred_region
        %s160 = ssub.s32 %s22, 1
      $region12: #{tpu_custom_call.1} parent=5 // pred_fallthru
        _
      %p161 = scmp.lt.s32.totalorder %s22, 2
      // Predicated region
      $region13: #{tpu_custom_call.1} parent=5 // pred_check
        %p162 = pneg %p161
      $region14: #{tpu_custom_call.1} parent=5 // pred_check_branch
        %164 = sbr.rel (%p162) target = $region16
      $region15: #{tpu_custom_call.1} parent=5 // pred_region
        // Predicated region
        $region17: #{tpu_custom_call.1} parent=15 // pred_check
          %p165 = pneg %p56
        $region18: #{tpu_custom_call.1} parent=15 // pred_check_branch
          %167 = sbr.rel (%p165) target = $region20
        $region19: #{tpu_custom_call.1} parent=15 // pred_region
          %s168 = sand.u32 %s46, 1
          %s169 = scalar_lea.sflag [#allocation3], %s168
          %s170 = sand.u32 %s46, 1
          %s171 = smul.addr %s170, 64
          %s172 = scalar_lea.vmem [#allocation2], %s171
          %s173 = smul.u32 2, %s30
          %175 = vsyncadd %s169, 0
          %s176 = smul.addr %s29, 8
          %s177 = sadd.s32 %s173, %s176
          %s178 = smul.addr %s177, 8
          %s179 = scalar_lea.hbm %s0, %s178
          %s180 = sshll.u32 %s179, 4
          %s181 = int_to_ptr.hbm [resolvable:$true] %s180
          %s182 = sshll.u32 %s172, 4
          %s183 = int_to_ptr.vmem [resolvable:$true] %s182
          %188 = dma.hbm_to_vmem [thread:$0]  %s181, 1024, %s183, %s169, 128, 128, 8
        $region20: #{tpu_custom_call.1} parent=15 // pred_fallthru
          _
        // Predicated region
        $region21: #{tpu_custom_call.1} parent=15 // pred_check
          %p189 = pneg %p84
        $region22: #{tpu_custom_call.1} parent=15 // pred_check_branch
          %191 = sbr.rel (%p189) target = $region24
        $region23: #{tpu_custom_call.1} parent=15 // pred_region
          %s192 = sand.u32 %s74, 1
          %s193 = scalar_lea.sflag [#allocation6], %s192
          %s194 = sand.u32 %s74, 1
          %s195 = smul.addr %s194, 16
          %s196 = scalar_lea.vmem [#allocation5], %s195
          %s197 = smul.u32 2, %s30
          %199 = vsyncadd %s193, 0
          %s200 = smul.addr %s29, 2
          %s201 = sadd.s32 %s197, %s200
          %s202 = smul.addr %s201, 8
          %s203 = scalar_lea.hbm %s1, %s202
          %s204 = sshll.u32 %s203, 4
          %s205 = int_to_ptr.hbm [resolvable:$true] %s204
          %s206 = sshll.u32 %s196, 4
          %s207 = int_to_ptr.vmem [resolvable:$true] %s206
          %212 = dma.hbm_to_vmem [thread:$0]  %s205, 256, %s207, %s193, 128, 128, 8
        $region24: #{tpu_custom_call.1} parent=15 // pred_fallthru
          _
      $region16: #{tpu_custom_call.1} parent=5 // pred_fallthru
        _
      %p213 = scmp.le.s32.totalorder 1, %s22
      %p214 = scmp.lt.s32.totalorder %s22, 3
      %p215 = pnand %p213, %p214
      %p216 = pneg %p215
      // Predicated region
      $region25: #{tpu_custom_call.1} parent=5 // pred_check
        _
      $region26: #{tpu_custom_call.1} parent=5 // pred_check_branch
        %218 = sbr.rel (%p215) target = $region28
      $region27: #{tpu_custom_call.1} parent=5 // pred_region
        %s219 = ssub.s32 %s22, 1
        %s220 = sand.u32 %s49, 1
        %s221 = scalar_lea.sflag [#allocation3], %s220
        %s222 = sand.u32 %s49, 1
        %s223 = smul.addr %s222, 64
        %s224 = scalar_lea.vmem [#allocation2], %s223
        // Predicated region
        $region29: #{tpu_custom_call.1} parent=27 // pred_check
          %p225 = pneg %p62
        $region30: #{tpu_custom_call.1} parent=27 // pred_check_branch
          %227 = sbr.rel (%p225) target = $region32
        $region31: #{tpu_custom_call.1} parent=27 // pred_region
          %229 = dma.done %s221, 1024
        $region32: #{tpu_custom_call.1} parent=27 // pred_fallthru
          _
        %s230 = sand.u32 %s77, 1
        %s231 = scalar_lea.sflag [#allocation6], %s230
        %s232 = sand.u32 %s77, 1
        %s233 = smul.addr %s232, 16
        %s234 = scalar_lea.vmem [#allocation5], %s233
        // Predicated region
        $region33: #{tpu_custom_call.1} parent=27 // pred_check
          %p235 = pneg %p90
        $region34: #{tpu_custom_call.1} parent=27 // pred_check_branch
          %237 = sbr.rel (%p235) target = $region36
        $region35: #{tpu_custom_call.1} parent=27 // pred_region
          %239 = dma.done %s231, 256
        $region36: #{tpu_custom_call.1} parent=27 // pred_fallthru
          _
        %s240 = sand.u32 %s49, 1
        %s241 = scalar_lea.sflag [#allocation3], %s240
        %s242 = sand.u32 %s49, 1
        %s243 = smul.addr %s242, 64
        %s244 = scalar_lea.vmem [#allocation2], %s243
        %p245 = pneg %p62
        %p246 = pneg %p59
        %s247 = sand.u32 %s77, 1
        %s248 = scalar_lea.sflag [#allocation6], %s247
        %s249 = sand.u32 %s77, 1
        %s250 = smul.addr %s249, 16
        %s251 = scalar_lea.vmem [#allocation5], %s250
        %p252 = pneg %p90
        %p253 = pneg %p87
        %p254 = pneg %p118
        %p255 = pneg %p115
        %s256 = sand.u32 %s105, 1
        %s257 = scalar_lea.sflag [#allocation4], %s256
        %s258 = sand.u32 %s105, 1
        %s259 = smul.addr %s258, 4
        %s260 = scalar_lea.vmem [#allocation7], %s259
        %p261 = pneg %p146
        %p262 = pneg %p143
        %s263 = sand.u32 %s133, 1
        %s264 = scalar_lea.sflag [#allocation9], %s263
        %s265 = sand.u32 %s133, 1
        %s266 = smul.addr %s265, 4
        %s267 = scalar_lea.vmem [#allocation8], %s266
        %s268 = smul.u32 2, %s32
        %s269 = smul.u32 2, %s32
        %v270 = vld [vmem:[%s224] sm:$0xff]
        %v271 = vld [vmem:[%s224 + $0x8] sm:$0xff]
        %v272 = vld [vmem:[%s224 + $0x10] sm:$0xff]
        %v273 = vld [vmem:[%s224 + $0x18] sm:$0xff]
        %v274 = vld [vmem:[%s224 + $0x20] sm:$0xff]
        %v275 = vld [vmem:[%s224 + $0x28] sm:$0xff]
        %v276 = vld [vmem:[%s224 + $0x30] sm:$0xff]
        %v277 = vld [vmem:[%s224 + $0x38] sm:$0xff]
        %v278 = vld [vmem:[%s234] sm:$0xff]
        %v279 = vld [vmem:[%s234 + $0x8] sm:$0xff]
        %vm280 = vcmask 130048
        %v281 = vsel %vm280, %v270, -inf
        %v282 = vsel %vm280, %v272, -inf
        %v283 = vsel %vm280, %v274, -inf
        %v284 = vmax.f32 %v281, %v283
        %v285 = vsel %vm280, %v276, -inf
        %v286 = vmax.f32 %v282, %v285
        %v287 = vmax.f32 %v284, %v286
        %v288 = vsel %vm280, %v271, -inf
        %v289 = vsel %vm280, %v273, -inf
        %v290 = vsel %vm280, %v275, -inf
        %v291 = vmax.f32 %v288, %v290
        %v292 = vsel %vm280, %v277, -inf
        %v293 = vmax.f32 %v289, %v292
        %v294 = vmax.f32 %v291, %v293
        %v295 = vsub.f32 %v270, %v287
        %v296 = vsub.f32 %v271, %v294
        %v297 = vsub.f32 %v272, %v287
        %v298 = vsub.f32 %v273, %v294
        %v299 = vsub.f32 %v274, %v287
        %v300 = vsub.f32 %v275, %v294
        %v301 = vsub.f32 %v276, %v287
        %v302 = vsub.f32 %v277, %v294
        %v303 = vmul.f32 %v295, 1.442695
        %v304 = vpow.pop %v303
        %v305 = vmul.f32 %v296, 1.442695
        %v306 = vpow.pop %v305
        %v307 = vmul.f32 %v297, 1.442695
        %v308 = vpow.pop %v307
        %v309 = vmul.f32 %v298, 1.442695
        %v310 = vpow.pop %v309
        %v311 = vmul.f32 %v299, 1.442695
        %v312 = vpow.pop %v311
        %v313 = vmul.f32 %v300, 1.442695
        %v314 = vpow.pop %v313
        %v315 = vmul.f32 %v301, 1.442695
        %v316 = vpow.pop %v315
        %v317 = vmul.f32 %v302, 1.442695
        %v318 = vpow.pop %v317
        %v319 = vsel %vm280, %v304, 0.0
        %v320 = vsel %vm280, %v308, 0.0
        %v321 = vadd.f32 %v319, %v320
        %v322 = vsel %vm280, %v312, 0.0
        %v323 = vadd.f32 %v321, %v322
        %v324 = vsel %vm280, %v316, 0.0
        %v325 = vadd.f32 %v323, %v324
        %v326 = vsel %vm280, %v306, 0.0
        %v327 = vsel %vm280, %v310, 0.0
        %v328 = vadd.f32 %v326, %v327
        %v329 = vsel %vm280, %v314, 0.0
        %v330 = vadd.f32 %v328, %v329
        %v331 = vsel %vm280, %v318, 0.0
        %v332 = vadd.f32 %v330, %v331
        %v333 = vrcp.pop %v325
        %v334 = vmul.f32 %v325, %v333
        %v335 = vsub.f32 1.0, %v334
        %v336 = vmul.f32 %v333, %v335
        %v337 = vadd.f32 %v333, %v336
        %vm338 = vweird.f32 %v325
        %vm339 = vweird.f32 %v333
        %vm340 = vmor %vm338, %vm339
        %v341 = vsel %vm340, %v333, %v337
        %v342 = vand.u32 2147483647, %v325
        %vm343 = vcmp.eq.f32.partialorder %v342, 8.507059e+37
        %v344 = vand.u32 %v325, 2147483648
        %v345 = vor.u32 1.1754944e-38, %v344
        %v346 = vsel %vm343, %v345, %v341
        %v347 = vmul.f32 1.0, %v346
        %v348 = vrcp.pop %v332
        %v349 = vmul.f32 %v332, %v348
        %v350 = vsub.f32 1.0, %v349
        %v351 = vmul.f32 %v348, %v350
        %v352 = vadd.f32 %v348, %v351
        %vm353 = vweird.f32 %v332
        %vm354 = vweird.f32 %v348
        %vm355 = vmor %vm353, %vm354
        %v356 = vsel %vm355, %v348, %v352
        %v357 = vand.u32 2147483647, %v332
        %vm358 = vcmp.eq.f32.partialorder %v357, 8.507059e+37
        %v359 = vand.u32 %v332, 2147483648
        %v360 = vor.u32 1.1754944e-38, %v359
        %v361 = vsel %vm358, %v360, %v356
        %v362 = vmul.f32 1.0, %v361
        %v363 = vmul.f32 %v304, %v347
        %v364 = vmul.f32 %v306, %v362
        %v365 = vmul.f32 %v308, %v347
        %v366 = vmul.f32 %v310, %v362
        %v367 = vmul.f32 %v312, %v347
        %v368 = vmul.f32 %v314, %v362
        %v369 = vmul.f32 %v316, %v347
        %v370 = vmul.f32 %v318, %v362
        %vm371 = vcmp.eq.s32.totalorder %v278, 0
        %vm372 = vcmp.eq.s32.totalorder %v279, 0
        %vm373 = vcmp.eq.s32.totalorder %v278, 1
        %vm374 = vcmp.eq.s32.totalorder %v279, 1
        %vm375 = vcmp.eq.s32.totalorder %v278, 2
        %vm376 = vcmp.eq.s32.totalorder %v279, 2
        %vm377 = vcmp.eq.s32.totalorder %v278, 3
        %vm378 = vcmp.eq.s32.totalorder %v279, 3
        %v379 = vsel %vm371, 1, 0
        %v380 = vsel %vm372, 1, 0
        %v381 = vsel %vm373, 1, 0
        %v382 = vsel %vm374, 1, 0
        %v383 = vsel %vm375, 1, 0
        %v384 = vsel %vm376, 1, 0
        %v385 = vsel %vm377, 1, 0
        %v386 = vsel %vm378, 1, 0
        %v387 = vcvt.s32.f32 %v379
        %v388 = vcvt.s32.f32 %v380
        %v389 = vcvt.s32.f32 %v381
        %v390 = vcvt.s32.f32 %v382
        %v391 = vcvt.s32.f32 %v383
        %v392 = vcvt.s32.f32 %v384
        %v393 = vcvt.s32.f32 %v385
        %v394 = vcvt.s32.f32 %v386
        %v395 = vsel %vm371, %v363, 0.0
        %v396 = vsel %vm372, %v364, 0.0
        %v397 = vsel %vm373, %v365, 0.0
        %v398 = vsel %vm374, %v366, 0.0
        %v399 = vsel %vm375, %v367, 0.0
        %v400 = vsel %vm376, %v368, 0.0
        %v401 = vsel %vm377, %v369, 0.0
        %v402 = vsel %vm378, %v370, 0.0
        %v403 = vsel %vm280, %v395, 0.0
        %v404 = vsel %vm280, %v396, 0.0
        %v405 = vadd.f32 %v403, %v404
        %v406 = vrot.slane %v405, 4
        %v407 = vadd.f32 %v405, %v406
        %v408 = vrot.slane %v407, 2
        %v409 = vadd.f32 %v407, %v408
        %v410 = vrot.slane %v409, 1
        %v411 = vadd.f32 %v409, %v410
        %v412 = vsel %vm280, %v397, 0.0
        %v413 = vsel %vm280, %v398, 0.0
        %v414 = vadd.f32 %v412, %v413
        %v415 = vrot.slane %v414, 4
        %v416 = vadd.f32 %v414, %v415
        %v417 = vrot.slane %v416, 2
        %v418 = vadd.f32 %v416, %v417
        %v419 = vrot.slane %v418, 1
        %v420 = vadd.f32 %v418, %v419
        %v421 = vsel %vm280, %v399, 0.0
        %v422 = vsel %vm280, %v400, 0.0
        %v423 = vadd.f32 %v421, %v422
        %v424 = vrot.slane %v423, 4
        %v425 = vadd.f32 %v423, %v424
        %v426 = vrot.slane %v425, 2
        %v427 = vadd.f32 %v425, %v426
        %v428 = vrot.slane %v427, 1
        %v429 = vadd.f32 %v427, %v428
        %v430 = vsel %vm280, %v401, 0.0
        %v431 = vsel %vm280, %v402, 0.0
        %v432 = vadd.f32 %v430, %v431
        %v433 = vrot.slane %v432, 4
        %v434 = vadd.f32 %v432, %v433
        %v435 = vrot.slane %v434, 2
        %v436 = vadd.f32 %v434, %v435
        %v437 = vrot.slane %v436, 1
        %v438 = vadd.f32 %v436, %v437
        %vm443 = vcmask 1041409
        %v444 = vsel %vm443, %v420, %v411
        %vm445 = vcmask 1042434
        %v446 = vsel %vm445, %v429, %v444
        %vm447 = vcmask 1043459
        %v448 = vsel %vm447, %v438, %v446
        %vm450 = vcmask 125952
        %451 = vst.msk [vmem:[%s260] sm:$0xf] %vm450, %v448
        %v452 = vadd.f32 %v363, %v387
        %v453 = vadd.f32 %v364, %v388
        %v454 = vadd.f32 %v365, %v389
        %v455 = vadd.f32 %v366, %v390
        %v456 = vadd.f32 %v367, %v391
        %v457 = vadd.f32 %v368, %v392
        %v458 = vadd.f32 %v369, %v393
        %v459 = vadd.f32 %v370, %v394
        %v460 = vsel %vm280, %v452, 0.0
        %v461 = vsel %vm280, %v453, 0.0
        %v462 = vadd.f32 %v460, %v461
        %v463 = vrot.slane %v462, 4
        %v464 = vadd.f32 %v462, %v463
        %v465 = vrot.slane %v464, 2
        %v466 = vadd.f32 %v464, %v465
        %v467 = vrot.slane %v466, 1
        %v468 = vadd.f32 %v466, %v467
        %v469 = vsel %vm280, %v454, 0.0
        %v470 = vsel %vm280, %v455, 0.0
        %v471 = vadd.f32 %v469, %v470
        %v472 = vrot.slane %v471, 4
        %v473 = vadd.f32 %v471, %v472
        %v474 = vrot.slane %v473, 2
        %v475 = vadd.f32 %v473, %v474
        %v476 = vrot.slane %v475, 1
        %v477 = vadd.f32 %v475, %v476
        %v478 = vsel %vm280, %v456, 0.0
        %v479 = vsel %vm280, %v457, 0.0
        %v480 = vadd.f32 %v478, %v479
        %v481 = vrot.slane %v480, 4
        %v482 = vadd.f32 %v480, %v481
        %v483 = vrot.slane %v482, 2
        %v484 = vadd.f32 %v482, %v483
        %v485 = vrot.slane %v484, 1
        %v486 = vadd.f32 %v484, %v485
        %v487 = vsel %vm280, %v458, 0.0
        %v488 = vsel %vm280, %v459, 0.0
        %v489 = vadd.f32 %v487, %v488
        %v490 = vrot.slane %v489, 4
        %v491 = vadd.f32 %v489, %v490
        %v492 = vrot.slane %v491, 2
        %v493 = vadd.f32 %v491, %v492
        %v494 = vrot.slane %v493, 1
        %v495 = vadd.f32 %v493, %v494
        %v500 = vsel %vm443, %v477, %v468
        %v501 = vsel %vm445, %v486, %v500
        %v502 = vsel %vm447, %v495, %v501
        %504 = vst.msk [vmem:[%s267] sm:$0xf] %vm450, %v502
        %s505 = sand.u32 %s105, 1
        %s506 = scalar_lea.sflag [#allocation4], %s505
        %s507 = sand.u32 %s105, 1
        %s508 = smul.addr %s507, 4
        %s509 = scalar_lea.vmem [#allocation7], %s508
        %s510 = sand.u32 %s133, 1
        %s511 = scalar_lea.sflag [#allocation9], %s510
        %s512 = sand.u32 %s133, 1
        %s513 = smul.addr %s512, 4
        %s514 = scalar_lea.vmem [#allocation8], %s513
        // Predicated region
        $region37: #{tpu_custom_call.1} parent=27 // pred_check
          %p515 = pneg %p115
        $region38: #{tpu_custom_call.1} parent=27 // pred_check_branch
          %517 = sbr.rel (%p515) target = $region40
        $region39: #{tpu_custom_call.1} parent=27 // pred_region
          %519 = vsyncadd %s506, 0
          %s520 = sadd.s32 %s32, %s31
          %s521 = smul.addr %s520, 4
          %s522 = scalar_lea.hbm %s2, %s521
          %s524 = sshll.u32 %s509, 4
          %s525 = int_to_ptr.vmem [resolvable:$true] %s524
          %s526 = sshll.u32 %s522, 4
          %s527 = int_to_ptr.hbm [resolvable:$true] %s526
          %529 = dma.vmem_to_hbm [thread:$0]  %s525, 64, %s527, %s506
        $region40: #{tpu_custom_call.1} parent=27 // pred_fallthru
          _
        // Predicated region
        $region41: #{tpu_custom_call.1} parent=27 // pred_check
          %p530 = pneg %p143
        $region42: #{tpu_custom_call.1} parent=27 // pred_check_branch
          %532 = sbr.rel (%p530) target = $region44
        $region43: #{tpu_custom_call.1} parent=27 // pred_region
          %534 = vsyncadd %s511, 0
          %s535 = sadd.s32 %s32, %s31
          %s536 = smul.addr %s535, 4
          %s537 = scalar_lea.hbm %s3, %s536
          %s539 = sshll.u32 %s514, 4
          %s540 = int_to_ptr.vmem [resolvable:$true] %s539
          %s541 = sshll.u32 %s537, 4
          %s542 = int_to_ptr.hbm [resolvable:$true] %s541
          %544 = dma.vmem_to_hbm [thread:$0]  %s540, 64, %s542, %s511
        $region44: #{tpu_custom_call.1} parent=27 // pred_fallthru
          _
      $region28: #{tpu_custom_call.1} parent=5 // pred_fallthru
        _
      %p545 = scmp.le.s32.totalorder 2, %s22
      // Predicated region
      $region45: #{tpu_custom_call.1} parent=5 // pred_check
        %p546 = pneg %p545
      $region46: #{tpu_custom_call.1} parent=5 // pred_check_branch
        %548 = sbr.rel (%p546) target = $region48
      $region47: #{tpu_custom_call.1} parent=5 // pred_region
        %s549 = ssub.s32 %s22, 2
        // Predicated region
        $region49: #{tpu_custom_call.1} parent=47 // pred_check
          %p550 = pneg %p121
        $region50: #{tpu_custom_call.1} parent=47 // pred_check_branch
          %552 = sbr.rel (%p550) target = $region52
        $region51: #{tpu_custom_call.1} parent=47 // pred_region
          %s553 = sand.u32 %s106, 1
          %s554 = scalar_lea.sflag [#allocation4], %s553
          %s555 = sand.u32 %s106, 1
          %s556 = smul.addr %s555, 4
          %s557 = scalar_lea.vmem [#allocation7], %s556
          %559 = dma.done %s554, 64
        $region52: #{tpu_custom_call.1} parent=47 // pred_fallthru
          _
        // Predicated region
        $region53: #{tpu_custom_call.1} parent=47 // pred_check
          %p560 = pneg %p149
        $region54: #{tpu_custom_call.1} parent=47 // pred_check_branch
          %562 = sbr.rel (%p560) target = $region56
        $region55: #{tpu_custom_call.1} parent=47 // pred_region
          %s563 = sand.u32 %s134, 1
          %s564 = scalar_lea.sflag [#allocation9], %s563
          %s565 = sand.u32 %s134, 1
          %s566 = smul.addr %s565, 4
          %s567 = scalar_lea.vmem [#allocation8], %s566
          %569 = dma.done %s564, 64
        $region56: #{tpu_custom_call.1} parent=47 // pred_fallthru
          _
      $region48: #{tpu_custom_call.1} parent=5 // pred_fallthru
        _
    $region6: #{tpu_custom_call.1} parent=1 // loop_footer
      %s26 = sadd.s32 1, %s22
    $region7: #{tpu_custom_call.1} parent=1 // loop_footer_branch
      %21 = sbr.rel target = $region3
    $region8: #{tpu_custom_call.1} parent=1 // loop_exit
      _
    %570 = vsyncpa [#allocation3], 1
    %s571 = scalar_lea.sflag [#allocation3], 1
    %572 = vsyncpa %s571, 1
    %573 = vsyncpa [#allocation6], 1
    %s574 = scalar_lea.sflag [#allocation6], 1
    %575 = vsyncpa %s574, 1
    %576 = vsyncpa [#allocation4], 1
    %s577 = scalar_lea.sflag [#allocation4], 1
    %578 = vsyncpa %s577, 1
    %579 = vsyncpa [#allocation9], 1
    %s580 = scalar_lea.sflag [#allocation9], 1
    %581 = vsyncpa %s580, 1

</llo_original>
